<compile_context>
chip_gen: v5e
topology: v5e:2x2
jax: 0.10.0
libtpu: 0.0.40
codegen_flags: <defaults>
</compile_context>

<pallas_src>
import jax
import jax.numpy as jnp
from jax.experimental import pallas as pl
from jax.experimental.pallas import tpu as pltpu

BN_EPS = 1e-5


def mlpblock_kernel(x_ref, w_ref, p_ref, o_ref):
    n = x_ref.shape[0]
    inv_n = 1.0 / n

    # Linear on the MXU at native input dtype, f32 accumulation.
    # (Bias intentionally omitted: cancelled by BN1's batch-mean subtraction.)
    y = jnp.dot(x_ref[...], w_ref[...], preferred_element_type=jnp.float32)

    # Packed per-feature params: rows 0..3 = gamma1, beta1, gamma2, beta2.
    p = p_ref[...].astype(jnp.float32)
    g1, b1, g2, b2 = p[0:1, :], p[1:2, :], p[2:3, :], p[3:4, :]

    # BatchNorm1d #1 (training-mode batch stats) + ReLU, fused scale/shift.
    mean1 = jnp.sum(y, axis=0, keepdims=True) * inv_n
    var1 = jnp.sum(y * y, axis=0, keepdims=True) * inv_n - mean1 * mean1
    var1 = jnp.maximum(var1, 0.0)  # one-pass E[y^2]-mean^2 can go slightly < 0
    s1 = g1 * jax.lax.rsqrt(var1 + BN_EPS)
    t1 = b1 - mean1 * s1
    z = jnp.maximum(y * s1 + t1, 0.0)

    # BatchNorm1d #2, same fused form.
    mean2 = jnp.sum(z, axis=0, keepdims=True) * inv_n
    var2 = jnp.sum(z * z, axis=0, keepdims=True) * inv_n - mean2 * mean2
    var2 = jnp.maximum(var2, 0.0)
    s2 = g2 * jax.lax.rsqrt(var2 + BN_EPS)
    t2 = b2 - mean2 * s2

    o_ref[...] = (z * s2 + t2).astype(o_ref.dtype)


def _vmem_budget_bytes():
    """Usable VMEM budget (bytes) for tile sizing on the current TPU."""
    try:
        cap = int(pltpu.get_tpu_info().vmem_capacity_bytes)
    except Exception:
        cap = 64 << 20  # conservative: v7x per-TensorCore physical VMEM
    # ~25% headroom for compiler scratch / semaphores, never claim > ~100 MiB.
    return min(int(cap * 0.75), 100 << 20)


def _live_bytes(N, K, tn, x_bytes, w_bytes, o_bytes):
    """Per-grid-step VMEM working-set estimate (conservative: x double-buffered,
    so the estimate stays valid even if the single-buffer request is rejected)."""
    return (2 * N * K * x_bytes          # x block (worst case: default 2 buffers)
            + 2 * K * tn * w_bytes       # weight column tile, double-buffered
            + 2 * N * tn * o_bytes       # output tile, double-buffered
            + 2 * 8 * tn * 4             # packed BN params, double-buffered
            + 2 * N * tn * 4)            # f32 intermediates y / z


def _select_tile(N, K, D_out, x_bytes, w_bytes, o_bytes, budget):
    """Largest lane-dense feature tile TN that fits the VMEM budget."""
    if D_out <= 128:
        tn = D_out  # single full-width tile (block dim == full array dim)
        live = _live_bytes(N, K, tn, x_bytes, w_bytes, o_bytes)
        if live <= budget:
            return tn, live
    else:
        for tn in (1024, 512, 256, 128):
            if tn > D_out:
                continue
            live = _live_bytes(N, K, tn, x_bytes, w_bytes, o_bytes)
            if live > budget:
                continue
            n_tiles = pl.cdiv(D_out, tn)
            # Prefer the largest tile that either covers everything in one step
            # or still leaves >=4 grid steps so weight DMA overlaps the matmul.
            if n_tiles == 1 or n_tiles >= 4 or tn == 128:
                return tn, live
    # TODO(synk): add a batch-tiled two-pass variant (accumulate sum / sum^2
    # per feature tile over an "arbitrary" N axis, finalize in a second sweep)
    # so large N*K working sets also fit v7x's 64 MiB VMEM.
    raise ValueError(
        f"MLPblock working set exceeds the VMEM budget ({budget} bytes) even at "
        f"the minimum feature tile; reduce N*K or add batch tiling."
    )


def mlpblock_forward(x, w, gamma1, beta1, gamma2, beta2):
    """x: (N, D_in); w: (D_in, D_out); gamma/beta: (D_out,) or (1, D_out)."""
    N, K = x.shape
    D_out = w.shape[1]

    x_bytes = jnp.dtype(x.dtype).itemsize
    w_bytes = jnp.dtype(w.dtype).itemsize
    o_bytes = x_bytes

    budget = _vmem_budget_bytes()
    TN, live = _select_tile(N, K, D_out, x_bytes, w_bytes, o_bytes, budget)
    n_tiles = pl.cdiv(D_out, TN)

    # Pack the 4 per-feature BN params into one sublane-aligned (8, D_out) tile.
    params = jnp.zeros((8, D_out), jnp.float32)
    params = params.at[0].set(jnp.reshape(gamma1, (-1,)))
    params = params.at[1].set(jnp.reshape(beta1, (-1,)))
    params = params.at[2].set(jnp.reshape(gamma2, (-1,)))
    params = params.at[3].set(jnp.reshape(beta2, (-1,)))

    # Explicit VMEM limit: working set + ~25% headroom, within the budget.
    vmem_limit = int(min(budget, max(live * 5 // 4, 16 << 20)))

    cost = pl.CostEstimate(
        flops=2 * N * K * D_out + 10 * N * D_out,
        transcendentals=2 * D_out,
        bytes_accessed=(N * K * x_bytes + K * D_out * w_bytes
                        + 8 * D_out * 4 + N * D_out * o_bytes),
    )

    def build(single_buffer_x):
        x_spec_kw = {"pipeline_mode": pl.Buffered(1)} if single_buffer_x else {}
        return pl.pallas_call(
            mlpblock_kernel,
            out_shape=jax.ShapeDtypeStruct((N, D_out), x.dtype),
            grid=(n_tiles,),
            in_specs=[
                pl.BlockSpec((N, K), lambda j: (0, 0), **x_spec_kw),  # x: one DMA
                pl.BlockSpec((K, TN), lambda j: (0, j)),               # weight cols
                pl.BlockSpec((8, TN), lambda j: (0, j)),               # BN params
            ],
            out_specs=pl.BlockSpec((N, TN), lambda j: (0, j)),
            compiler_params=pltpu.CompilerParams(
                dimension_semantics=("parallel",),
                vmem_limit_bytes=vmem_limit,
            ),
            cost_estimate=cost,
        )

    try:
        return build(single_buffer_x=True)(x, w, params)
    except Exception:
        # This JAX build may reject a 1-deep pipeline buffer; fall back to the
        # default double-buffered x block (already covered by the VMEM estimate).
        return build(single_buffer_x=False)(x, w, params)


def init_params(key, input_dim, output_dim):
    """Deterministic parameter init mirroring the PyTorch module's __init__."""
    k_w, k_b = jax.random.split(key)
    # MLPinit: nn.init.uniform_(weight, -0.1, 0.1); stored transposed (in, out).
    w = jax.random.uniform(
        k_w, (input_dim, output_dim), jnp.float32, minval=-0.1, maxval=0.1
    )
    # nn.Linear default bias init (used only by the reference; mathematically
    # cancelled by training-mode BN1, so the kernel omits it).
    bound = 1.0 / jnp.sqrt(jnp.float32(input_dim))
    b = jax.random.uniform(
        k_b, (1, output_dim), jnp.float32, minval=-bound, maxval=bound
    )
    # BatchNorm1d defaults: weight=1, bias=0 (affine=True).
    gamma1 = jnp.ones((output_dim,), jnp.float32)
    beta1 = jnp.zeros((output_dim,), jnp.float32)
    gamma2 = jnp.ones((output_dim,), jnp.float32)
    beta2 = jnp.zeros((output_dim,), jnp.float32)
    return w, b, gamma1, beta1, gamma2, beta2


def reference_forward(x, w, b, gamma1, beta1, gamma2, beta2):
    """Pure-JAX reference of the PyTorch forward (training-mode BN, with bias)."""
    y = x @ w + b
    m1 = y.mean(0, keepdims=True)
    v1 = ((y - m1) ** 2).mean(0, keepdims=True)
    y = (y - m1) / jnp.sqrt(v1 + BN_EPS) * jnp.reshape(gamma1, (1, -1)) \
        + jnp.reshape(beta1, (1, -1))
    y = jnp.maximum(y, 0.0)
    m2 = y.mean(0, keepdims=True)
    v2 = ((y - m2) ** 2).mean(0, keepdims=True)
    return (y - m2) / jnp.sqrt(v2 + BN_EPS) * jnp.reshape(gamma2, (1, -1)) \
        + jnp.reshape(beta2, (1, -1))


if __name__ == "__main__":
    key = jax.random.PRNGKey(0)
    k_x, k_p, k_g1, k_b1, k_g2, k_b2 = jax.random.split(key, 6)

    N, input_dim, output_dim = 8, 16, 32
    x = jax.random.normal(k_x, (N, input_dim), jnp.float32)
    w, b, gamma1, beta1, gamma2, beta2 = init_params(k_p, input_dim, output_dim)

    # Check 1: module defaults (gamma=1, beta=0), as constructed by __init__.
    out = mlpblock_forward(x, w, gamma1, beta1, gamma2, beta2)
    out = jax.block_until_ready(out)
    ref = reference_forward(x, w, b, gamma1, beta1, gamma2, beta2)
    assert out.shape == (N, output_dim)
    assert jnp.allclose(out, ref, atol=1e-4, rtol=1e-4)

    # Check 2: non-trivial affine BN params to exercise the fused scale/shift.
    g1 = jax.random.normal(k_g1, (output_dim,), jnp.float32)
    b1_ = jax.random.normal(k_b1, (output_dim,), jnp.float32)
    g2 = jax.random.normal(k_g2, (output_dim,), jnp.float32)
    b2_ = jax.random.normal(k_b2, (output_dim,), jnp.float32)
    out2 = jax.block_until_ready(mlpblock_forward(x, w, g1, b1_, g2, b2_))
    ref2 = reference_forward(x, w, b, g1, b1_, g2, b2_)
    assert jnp.allclose(out2, ref2, atol=1e-4, rtol=1e-4)

    print("KERNEL_OK")
</pallas_src>

<mosaic_0001>
module attributes {stable_mosaic.version = 11 : i64} {
  func.func @mlpblock_kernel(%arg0: i32, %arg1: memref<8x16xf32, #tpu.memory_space<vmem>>, %arg2: memref<16x32xf32, #tpu.memory_space<vmem>>, %arg3: memref<8x32xf32, #tpu.memory_space<vmem>>, %arg4: memref<8x32xf32, #tpu.memory_space<vmem>>) attributes {dimension_semantics = [#tpu.dimension_semantics<parallel>], iteration_bounds = array<i64: 1>, scalar_prefetch = 0 : i64, scratch_operands = 0 : i64, tpu.core_type = #tpu.core_type<tc>, window_params = [{pipeline_mode = #tpu.pipeline_mode<synchronous>, transform_indices = @transform_0, window_bounds = array<i64: 8, 16>}, {transform_indices = @transform_1, window_bounds = array<i64: 16, 32>}, {transform_indices = @transform_2, window_bounds = array<i64: 8, 32>}, {transform_indices = @transform_3, window_bounds = array<i64: 8, 32>}]} {
    %c0 = arith.constant 0 : index
    %c0_0 = arith.constant 0 : index
    %0 = vector.load %arg1[%c0, %c0_0] : memref<8x16xf32, #tpu.memory_space<vmem>>, vector<8x16xf32>
    %c0_1 = arith.constant 0 : index
    %c0_2 = arith.constant 0 : index
    %1 = vector.load %arg2[%c0_1, %c0_2] : memref<16x32xf32, #tpu.memory_space<vmem>>, vector<16x32xf32>
    %cst = arith.constant dense<0.000000e+00> : vector<8x32xf32>
    %2 = tpu.matmul %0, %1, %cst {dimension_numbers = #tpu.dot_dimension_numbers<[1], [0], [0], [1], [0, 0, 1, 1], [], []>} : vector<8x16xf32>, vector<16x32xf32>, vector<8x32xf32> -> vector<8x32xf32>
    %c0_3 = arith.constant 0 : index
    %c0_4 = arith.constant 0 : index
    %3 = vector.load %arg3[%c0_3, %c0_4] : memref<8x32xf32, #tpu.memory_space<vmem>>, vector<8x32xf32>
    %4 = vector.extract_strided_slice %3 {offsets = [0, 0], sizes = [1, 32], strides = [1, 1]} : vector<8x32xf32> to vector<1x32xf32>
    %5 = vector.extract_strided_slice %3 {offsets = [1, 0], sizes = [1, 32], strides = [1, 1]} : vector<8x32xf32> to vector<1x32xf32>
    %6 = vector.extract_strided_slice %3 {offsets = [2, 0], sizes = [1, 32], strides = [1, 1]} : vector<8x32xf32> to vector<1x32xf32>
    %7 = vector.extract_strided_slice %3 {offsets = [3, 0], sizes = [1, 32], strides = [1, 1]} : vector<8x32xf32> to vector<1x32xf32>
    %cst_5 = arith.constant dense<0.000000e+00> : vector<32xf32>
    %8 = vector.multi_reduction <add>, %2, %cst_5 [0] : vector<8x32xf32> to vector<32xf32>
    %9 = vector.shape_cast %8 : vector<32xf32> to vector<1x32xf32>
    %cst_6 = arith.constant 1.250000e-01 : f32
    %10 = vector.broadcast %cst_6 : f32 to vector<1x32xf32>
    %11 = arith.mulf %9, %10 : vector<1x32xf32>
    %12 = arith.mulf %2, %2 : vector<8x32xf32>
    %cst_7 = arith.constant dense<0.000000e+00> : vector<32xf32>
    %13 = vector.multi_reduction <add>, %12, %cst_7 [0] : vector<8x32xf32> to vector<32xf32>
    %14 = vector.shape_cast %13 : vector<32xf32> to vector<1x32xf32>
    %cst_8 = arith.constant 1.250000e-01 : f32
    %15 = vector.broadcast %cst_8 : f32 to vector<1x32xf32>
    %16 = arith.mulf %14, %15 : vector<1x32xf32>
    %17 = arith.mulf %11, %11 : vector<1x32xf32>
    %18 = arith.subf %16, %17 : vector<1x32xf32>
    %cst_9 = arith.constant 0.000000e+00 : f32
    %19 = vector.broadcast %cst_9 : f32 to vector<1x32xf32>
    %20 = arith.maximumf %18, %19 : vector<1x32xf32>
    %cst_10 = arith.constant 9.99999974E-6 : f32
    %21 = vector.broadcast %cst_10 : f32 to vector<1x32xf32>
    %22 = arith.addf %20, %21 : vector<1x32xf32>
    %23 = math.rsqrt %22 : vector<1x32xf32>
    %24 = arith.mulf %4, %23 : vector<1x32xf32>
    %25 = arith.mulf %11, %24 : vector<1x32xf32>
    %26 = arith.subf %5, %25 : vector<1x32xf32>
    %27 = vector.broadcast %24 : vector<1x32xf32> to vector<8x32xf32>
    %28 = arith.mulf %2, %27 : vector<8x32xf32>
    %29 = vector.broadcast %26 : vector<1x32xf32> to vector<8x32xf32>
    %30 = arith.addf %28, %29 : vector<8x32xf32>
    %cst_11 = arith.constant 0.000000e+00 : f32
    %31 = vector.broadcast %cst_11 : f32 to vector<8x32xf32>
    %32 = arith.maximumf %30, %31 : vector<8x32xf32>
    %cst_12 = arith.constant dense<0.000000e+00> : vector<32xf32>
    %33 = vector.multi_reduction <add>, %32, %cst_12 [0] : vector<8x32xf32> to vector<32xf32>
    %34 = vector.shape_cast %33 : vector<32xf32> to vector<1x32xf32>
    %cst_13 = arith.constant 1.250000e-01 : f32
    %35 = vector.broadcast %cst_13 : f32 to vector<1x32xf32>
    %36 = arith.mulf %34, %35 : vector<1x32xf32>
    %37 = arith.mulf %32, %32 : vector<8x32xf32>
    %cst_14 = arith.constant dense<0.000000e+00> : vector<32xf32>
    %38 = vector.multi_reduction <add>, %37, %cst_14 [0] : vector<8x32xf32> to vector<32xf32>
    %39 = vector.shape_cast %38 : vector<32xf32> to vector<1x32xf32>
    %cst_15 = arith.constant 1.250000e-01 : f32
    %40 = vector.broadcast %cst_15 : f32 to vector<1x32xf32>
    %41 = arith.mulf %39, %40 : vector<1x32xf32>
    %42 = arith.mulf %36, %36 : vector<1x32xf32>
    %43 = arith.subf %41, %42 : vector<1x32xf32>
    %cst_16 = arith.constant 0.000000e+00 : f32
    %44 = vector.broadcast %cst_16 : f32 to vector<1x32xf32>
    %45 = arith.maximumf %43, %44 : vector<1x32xf32>
    %cst_17 = arith.constant 9.99999974E-6 : f32
    %46 = vector.broadcast %cst_17 : f32 to vector<1x32xf32>
    %47 = arith.addf %45, %46 : vector<1x32xf32>
    %48 = math.rsqrt %47 : vector<1x32xf32>
    %49 = arith.mulf %6, %48 : vector<1x32xf32>
    %50 = arith.mulf %36, %49 : vector<1x32xf32>
    %51 = arith.subf %7, %50 : vector<1x32xf32>
    %52 = vector.broadcast %49 : vector<1x32xf32> to vector<8x32xf32>
    %53 = arith.mulf %32, %52 : vector<8x32xf32>
    %54 = vector.broadcast %51 : vector<1x32xf32> to vector<8x32xf32>
    %55 = arith.addf %53, %54 : vector<8x32xf32>
    %c0_18 = arith.constant 0 : index
    %c0_19 = arith.constant 0 : index
    %56 = vector.load %arg4[%c0_18, %c0_19] : memref<8x32xf32, #tpu.memory_space<vmem>>, vector<8x32xf32>
    tpu.vector_store %arg4[%c0_18, %c0_19], %55 {strides = array<i32>} : memref<8x32xf32, #tpu.memory_space<vmem>>, vector<8x32xf32>,
    return
  }
  func.func @transform_0(%arg0: i32) -> (i32, i32) {
    %c0_i32 = arith.constant 0 : i32
    %c0_i32_0 = arith.constant 0 : i32
    %c0_i32_1 = arith.constant 0 : i32
    return %c0_i32, %c0_i32_0 : i32, i32
  }
  func.func @transform_1(%arg0: i32) -> (i32, i32) {
    %c0_i32 = arith.constant 0 : i32
    %c0_i32_0 = arith.constant 0 : i32
    return %c0_i32, %arg0 : i32, i32
  }
  func.func @transform_2(%arg0: i32) -> (i32, i32) {
    %c0_i32 = arith.constant 0 : i32
    %c0_i32_0 = arith.constant 0 : i32
    return %c0_i32, %arg0 : i32, i32
  }
  func.func @transform_3(%arg0: i32) -> (i32, i32) {
    %c0_i32 = arith.constant 0 : i32
    %c0_i32_0 = arith.constant 0 : i32
    return %c0_i32, %arg0 : i32, i32
  }
}

module attributes {stable_mosaic.version = 11 : i64} {
  func.func @mlpblock_kernel(%arg0: i32, %arg1: memref<8x16xf32, #tpu.memory_space<vmem>>, %arg2: memref<16x32xf32, #tpu.memory_space<vmem>>, %arg3: memref<8x32xf32, #tpu.memory_space<vmem>>, %arg4: memref<8x32xf32, #tpu.memory_space<vmem>>) attributes {dimension_semantics = [#tpu.dimension_semantics<parallel>], iteration_bounds = array<i64: 1>, scalar_prefetch = 0 : i64, scratch_operands = 0 : i64, tpu.core_type = #tpu.core_type<tc>, window_params = [{pipeline_mode = #tpu.pipeline_mode<synchronous>, transform_indices = @transform_0, window_bounds = array<i64: 8, 16>}, {transform_indices = @transform_1, window_bounds = array<i64: 16, 32>}, {transform_indices = @transform_2, window_bounds = array<i64: 8, 32>}, {transform_indices = @transform_3, window_bounds = array<i64: 8, 32>}]} {
    %c0 = arith.constant 0 : index
    %c0_0 = arith.constant 0 : index
    %0 = vector.load %arg1[%c0, %c0_0] : memref<8x16xf32, #tpu.memory_space<vmem>>, vector<8x16xf32>
    %c0_1 = arith.constant 0 : index
    %c0_2 = arith.constant 0 : index
    %1 = vector.load %arg2[%c0_1, %c0_2] : memref<16x32xf32, #tpu.memory_space<vmem>>, vector<16x32xf32>
    %cst = arith.constant dense<0.000000e+00> : vector<8x32xf32>
    %2 = tpu.matmul %0, %1, %cst {dimension_numbers = #tpu.dot_dimension_numbers<[1], [0], [0], [1], [0, 0, 1, 1], [], []>} : vector<8x16xf32>, vector<16x32xf32>, vector<8x32xf32> -> vector<8x32xf32>
    %c0_3 = arith.constant 0 : index
    %c0_4 = arith.constant 0 : index
    %3 = vector.load %arg3[%c0_3, %c0_4] : memref<8x32xf32, #tpu.memory_space<vmem>>, vector<8x32xf32>
    %4 = vector.extract_strided_slice %3 {offsets = [0, 0], sizes = [1, 32], strides = [1, 1]} : vector<8x32xf32> to vector<1x32xf32>
    %5 = vector.extract_strided_slice %3 {offsets = [1, 0], sizes = [1, 32], strides = [1, 1]} : vector<8x32xf32> to vector<1x32xf32>
    %6 = vector.extract_strided_slice %3 {offsets = [2, 0], sizes = [1, 32], strides = [1, 1]} : vector<8x32xf32> to vector<1x32xf32>
    %7 = vector.extract_strided_slice %3 {offsets = [3, 0], sizes = [1, 32], strides = [1, 1]} : vector<8x32xf32> to vector<1x32xf32>
    %cst_5 = arith.constant dense<0.000000e+00> : vector<32xf32>
    %8 = vector.multi_reduction <add>, %2, %cst_5 [0] : vector<8x32xf32> to vector<32xf32>
    %9 = vector.shape_cast %8 : vector<32xf32> to vector<1x32xf32>
    %cst_6 = arith.constant 1.250000e-01 : f32
    %10 = vector.broadcast %cst_6 : f32 to vector<1x32xf32>
    %11 = arith.mulf %9, %10 : vector<1x32xf32>
    %12 = arith.mulf %2, %2 : vector<8x32xf32>
    %cst_7 = arith.constant dense<0.000000e+00> : vector<32xf32>
    %13 = vector.multi_reduction <add>, %12, %cst_7 [0] : vector<8x32xf32> to vector<32xf32>
    %14 = vector.shape_cast %13 : vector<32xf32> to vector<1x32xf32>
    %cst_8 = arith.constant 1.250000e-01 : f32
    %15 = vector.broadcast %cst_8 : f32 to vector<1x32xf32>
    %16 = arith.mulf %14, %15 : vector<1x32xf32>
    %17 = arith.mulf %11, %11 : vector<1x32xf32>
    %18 = arith.subf %16, %17 : vector<1x32xf32>
    %cst_9 = arith.constant 0.000000e+00 : f32
    %19 = vector.broadcast %cst_9 : f32 to vector<1x32xf32>
    %20 = arith.maximumf %18, %19 : vector<1x32xf32>
    %cst_10 = arith.constant 9.99999974E-6 : f32
    %21 = vector.broadcast %cst_10 : f32 to vector<1x32xf32>
    %22 = arith.addf %20, %21 : vector<1x32xf32>
    %23 = math.rsqrt %22 : vector<1x32xf32>
    %24 = arith.mulf %4, %23 : vector<1x32xf32>
    %25 = arith.mulf %11, %24 : vector<1x32xf32>
    %26 = arith.subf %5, %25 : vector<1x32xf32>
    %27 = vector.broadcast %24 : vector<1x32xf32> to vector<8x32xf32>
    %28 = arith.mulf %2, %27 : vector<8x32xf32>
    %29 = vector.broadcast %26 : vector<1x32xf32> to vector<8x32xf32>
    %30 = arith.addf %28, %29 : vector<8x32xf32>
    %cst_11 = arith.constant 0.000000e+00 : f32
    %31 = vector.broadcast %cst_11 : f32 to vector<8x32xf32>
    %32 = arith.maximumf %30, %31 : vector<8x32xf32>
    %cst_12 = arith.constant dense<0.000000e+00> : vector<32xf32>
    %33 = vector.multi_reduction <add>, %32, %cst_12 [0] : vector<8x32xf32> to vector<32xf32>
    %34 = vector.shape_cast %33 : vector<32xf32> to vector<1x32xf32>
    %cst_13 = arith.constant 1.250000e-01 : f32
    %35 = vector.broadcast %cst_13 : f32 to vector<1x32xf32>
    %36 = arith.mulf %34, %35 : vector<1x32xf32>
    %37 = arith.mulf %32, %32 : vector<8x32xf32>
    %cst_14 = arith.constant dense<0.000000e+00> : vector<32xf32>
    %38 = vector.multi_reduction <add>, %37, %cst_14 [0] : vector<8x32xf32> to vector<32xf32>
    %39 = vector.shape_cast %38 : vector<32xf32> to vector<1x32xf32>
    %cst_15 = arith.constant 1.250000e-01 : f32
    %40 = vector.broadcast %cst_15 : f32 to vector<1x32xf32>
    %41 = arith.mulf %39, %40 : vector<1x32xf32>
    %42 = arith.mulf %36, %36 : vector<1x32xf32>
    %43 = arith.subf %41, %42 : vector<1x32xf32>
    %cst_16 = arith.constant 0.000000e+00 : f32
    %44 = vector.broadcast %cst_16 : f32 to vector<1x32xf32>
    %45 = arith.maximumf %43, %44 : vector<1x32xf32>
    %cst_17 = arith.constant 9.99999974E-6 : f32
    %46 = vector.broadcast %cst_17 : f32 to vector<1x32xf32>
    %47 = arith.addf %45, %46 : vector<1x32xf32>
    %48 = math.rsqrt %47 : vector<1x32xf32>
    %49 = arith.mulf %6, %48 : vector<1x32xf32>
    %50 = arith.mulf %36, %49 : vector<1x32xf32>
    %51 = arith.subf %7, %50 : vector<1x32xf32>
    %52 = vector.broadcast %49 : vector<1x32xf32> to vector<8x32xf32>
    %53 = arith.mulf %32, %52 : vector<8x32xf32>
    %54 = vector.broadcast %51 : vector<1x32xf32> to vector<8x32xf32>
    %55 = arith.addf %53, %54 : vector<8x32xf32>
    %c0_18 = arith.constant 0 : index
    %c0_19 = arith.constant 0 : index
    %56 = vector.load %arg4[%c0_18, %c0_19] : memref<8x32xf32, #tpu.memory_space<vmem>>, vector<8x32xf32>
    tpu.vector_store %arg4[%c0_18, %c0_19], %55 {strides = array<i32>} : memref<8x32xf32, #tpu.memory_space<vmem>>, vector<8x32xf32>,
    return
  }
  func.func @transform_0(%arg0: i32) -> (i32, i32) {
    %c0_i32 = arith.constant 0 : i32
    %c0_i32_0 = arith.constant 0 : i32
    %c0_i32_1 = arith.constant 0 : i32
    return %c0_i32, %c0_i32_0 : i32, i32
  }
  func.func @transform_1(%arg0: i32) -> (i32, i32) {
    %c0_i32 = arith.constant 0 : i32
    %c0_i32_0 = arith.constant 0 : i32
    return %c0_i32, %arg0 : i32, i32
  }
  func.func @transform_2(%arg0: i32) -> (i32, i32) {
    %c0_i32 = arith.constant 0 : i32
    %c0_i32_0 = arith.constant 0 : i32
    return %c0_i32, %arg0 : i32, i32
  }
  func.func @transform_3(%arg0: i32) -> (i32, i32) {
    %c0_i32 = arith.constant 0 : i32
    %c0_i32_0 = arith.constant 0 : i32
    return %c0_i32, %arg0 : i32, i32
  }
}

</mosaic_0001>

<llo_original>
// kernel: tpu_custom_call.1
$region0: #{tpu_custom_call.1}
  #allocation0 [shape = 'u32[]', space=smem, size = 0x4, offset = 0x4, fixed_abs, tag = 'smem constant byte address 0x4 - core index']
  #allocation1 [shape = 'u32[72,128]{1,0:T(1,128)}', space=vmem, size = 0x9000, scoped, tag = 'internal scratch']
  %s0 = inlined_call_operand.hbm [shape: f32[8,16], index: 0, kind: input, shape index: {}]
  %s1 = inlined_call_operand.hbm [shape: f32[16,32], index: 1, kind: input, shape index: {}]
  %s2 = inlined_call_operand.hbm [shape: f32[8,32], index: 2, kind: input, shape index: {}]
  %s3 = inlined_call_operand.hbm [shape: f32[8,32], index: 3, kind: output, shape index: {}]
  %s4 = sld [smem:[#allocation0]]
  $region34: #{tpu_custom_call.1} parent=0
    _
  %s6 = ssub.s32 1, %s4
  %s7 = scalar_select 0, %s6, %s4
  $region1: #{tpu_custom_call.1} parent=0
    #allocation2 [shape = 'u8[4096]{0}', space=vmem, size = 0x1000, scoped, tag = 'input window, operand 0, single buffered']
    #allocation3 [shape = 's32[1]{0}', space=sflag, size = 0x4, scoped, tag = 'scoped memory for tpu_custom_call.1']
    #allocation4 [shape = 's32[1]{0}', space=sflag, size = 0x4, scoped, tag = 'scoped memory for tpu_custom_call.1']
    #allocation5 [shape = 'u8[8192]{0}', space=vmem, size = 0x2000, scoped, tag = 'input window, operand 1, single buffered']
    #allocation6 [shape = 's32[1]{0}', space=sflag, size = 0x4, scoped, tag = 'scoped memory for tpu_custom_call.1']
    #allocation7 [shape = 'u8[4096]{0}', space=vmem, size = 0x1000, scoped, tag = 'input window, operand 2, single buffered']
    #allocation8 [shape = 'u8[4096]{0}', space=vmem, size = 0x1000, scoped, tag = 'output window, operand 0, single buffered']
    %8 = vsyncpa [#allocation3], 0
    %9 = vsyncpa [#allocation6], 0
    %10 = vsyncpa [#allocation4], 0
    // Predicated region
    $region2: #{tpu_custom_call.1} parent=1 // pred_check
      _
    $region3: #{tpu_custom_call.1} parent=1 // pred_check_branch
      %12 = sbr.rel (0) target = $region5
    $region4: #{tpu_custom_call.1} parent=1 // pred_region
      %14 = vsyncadd [#allocation3], 0
      %s16 = sshll.u32 %s0, 4
      %s17 = int_to_ptr.hbm [resolvable:$true] %s16
      %s18 = sshll.u32 [#allocation2], 4
      %s19 = int_to_ptr.vmem [resolvable:$true] %s18
      %21 = dma.hbm_to_vmem [thread:$0]  %s17, 128, %s19, [#allocation3]
    $region5: #{tpu_custom_call.1} parent=1 // pred_fallthru
      _
    // Predicated region
    $region6: #{tpu_custom_call.1} parent=1 // pred_check
      _
    $region7: #{tpu_custom_call.1} parent=1 // pred_check_branch
      %23 = sbr.rel (0) target = $region9
    $region8: #{tpu_custom_call.1} parent=1 // pred_region
      %25 = vsyncadd [#allocation6], 0
      %s26 = sshll.u32 %s1, 4
      %s27 = int_to_ptr.hbm [resolvable:$true] %s26
      %s28 = sshll.u32 [#allocation5], 4
      %s29 = int_to_ptr.vmem [resolvable:$true] %s28
      %34 = dma.hbm_to_vmem [thread:$0]  %s27, 256, %s29, [#allocation6], 128, 128, 8
    $region9: #{tpu_custom_call.1} parent=1 // pred_fallthru
      _
    // Predicated region
    $region10: #{tpu_custom_call.1} parent=1 // pred_check
      _
    $region11: #{tpu_custom_call.1} parent=1 // pred_check_branch
      %36 = sbr.rel (0) target = $region13
    $region12: #{tpu_custom_call.1} parent=1 // pred_region
      %38 = vsyncadd [#allocation6], 0
      %s40 = sshll.u32 %s2, 4
      %s41 = int_to_ptr.hbm [resolvable:$true] %s40
      %s42 = sshll.u32 [#allocation7], 4
      %s43 = int_to_ptr.vmem [resolvable:$true] %s42
      %45 = dma.hbm_to_vmem [thread:$0]  %s41, 128, %s43, [#allocation6]
    $region13: #{tpu_custom_call.1} parent=1 // pred_fallthru
      _
    // Predicated region
    $region14: #{tpu_custom_call.1} parent=1 // pred_check
      _
    $region15: #{tpu_custom_call.1} parent=1 // pred_check_branch
      %47 = sbr.rel (0) target = $region17
    $region16: #{tpu_custom_call.1} parent=1 // pred_region
      %49 = dma.done [#allocation3], 128
    $region17: #{tpu_custom_call.1} parent=1 // pred_fallthru
      _
    // Predicated region
    $region18: #{tpu_custom_call.1} parent=1 // pred_check
      _
    $region19: #{tpu_custom_call.1} parent=1 // pred_check_branch
      %51 = sbr.rel (0) target = $region21
    $region20: #{tpu_custom_call.1} parent=1 // pred_region
      %53 = dma.done [#allocation6], 256
    $region21: #{tpu_custom_call.1} parent=1 // pred_fallthru
      _
    // Predicated region
    $region22: #{tpu_custom_call.1} parent=1 // pred_check
      _
    $region23: #{tpu_custom_call.1} parent=1 // pred_check_branch
      %55 = sbr.rel (0) target = $region25
    $region24: #{tpu_custom_call.1} parent=1 // pred_region
      %57 = dma.done [#allocation6], 128
    $region25: #{tpu_custom_call.1} parent=1 // pred_fallthru
      _
    %v58 = vld [vmem:[#allocation2] sm:$0xff]
    %v59 = vld [vmem:[#allocation5] sm:$0xff]
    %v60 = vld [vmem:[#allocation5 + $0x8] sm:$0xff]
    %vm61 = vcmask 130048
    %v63 = vsel %vm61, %v58, 0
    %65 = vmatpush.msra.mxu0 0.0
    %66 = vmatpush.msra.mxu0 0.0
    %67 = vmatpush.msra.mxu0 0.0
    %68 = vmatpush.msra.mxu0 0.0
    %69 = vmatpush.msra.mxu0 0.0
    %70 = vmatpush.msra.mxu0 0.0
    %71 = vmatpush.msra.mxu0 0.0
    %72 = vmatpush.msra.mxu0 0.0
    %73 = vmatpush.msra.mxu0 0.0
    %74 = vmatpush.msra.mxu0 0.0
    %75 = vmatpush.msra.mxu0 0.0
    %76 = vmatpush.msra.mxu0 0.0
    %77 = vmatpush.msra.mxu0 0.0
    %78 = vmatpush.msra.mxu0 0.0
    %79 = vmatpush.msra.mxu0 %v60
    %80 = vmatpush.msra.mxu0 %v59
    %81 = vmatmul.f32.gmra.mxu0 %v63
    %v82 = vpop.f32.mrf.mxu0
    %v83 = vadd.f32 0.0, %v82
    %84 = vdwg.mxu0
    %v85 = vld [vmem:[#allocation7] sm:$0xff]
    %vm86 = vcmask 261120
    %v87 = vsel %vm86, %v83, 0.0
    %v88 = vrot.slane %v87, 4
    %v89 = vadd.f32 %v87, %v88
    %v90 = vrot.slane %v89, 2
    %v91 = vadd.f32 %v89, %v90
    %v92 = vrot.slane %v91, 1
    %v93 = vadd.f32 %v91, %v92
    %v94 = vmul.f32 %v93, 0.125
    %v95 = vmul.f32 %v83, %v83
    %v96 = vsel %vm86, %v95, 0.0
    %v97 = vrot.slane %v96, 4
    %v98 = vadd.f32 %v96, %v97
    %v99 = vrot.slane %v98, 2
    %v100 = vadd.f32 %v98, %v99
    %v101 = vrot.slane %v100, 1
    %v102 = vadd.f32 %v100, %v101
    %v103 = vmul.f32 %v102, 0.125
    %v104 = vmul.f32 %v94, %v94
    %v105 = vsub.f32 %v103, %v104
    %v106 = vmax.f32 %v105, 0.0
    %v107 = vadd.f32 %v106, 1e-05
    %v108 = vrsqrt.pop %v107
    %v109 = vmul.f32 %v108, %v107
    %v110 = vmul.f32 %v109, %v108
    %v111 = vmul.f32 0.5, %v110
    %v112 = vsub.f32 1.5, %v111
    %v113 = vmul.f32 %v108, %v112
    %vm114 = vweird.f32 %v107
    %vm115 = vweird.f32 %v108
    %vm116 = vmor %vm114, %vm115
    %v117 = vsel %vm116, %v108, %v113
    %v118 = vmul.f32 %v85, %v117
    %v119 = vmul.f32 %v94, %v118
    %v121 = vrot.slane %v119, 7
    %v123 = vsub.f32 %v85, %v121
    %v124 = vperm.slane %v118, 0
    %v125 = vmul.f32 %v83, %v124
    %v126 = vperm.slane %v123, 1
    %v127 = vadd.f32 %v125, %v126
    %v128 = vmax.f32 %v127, 0.0
    %v129 = vsel %vm86, %v128, 0.0
    %v130 = vrot.slane %v129, 4
    %v131 = vadd.f32 %v129, %v130
    %v132 = vrot.slane %v131, 2
    %v133 = vadd.f32 %v131, %v132
    %v134 = vrot.slane %v133, 1
    %v135 = vadd.f32 %v133, %v134
    %v136 = vmul.f32 %v135, 0.125
    %v137 = vmul.f32 %v128, %v128
    %v138 = vsel %vm86, %v137, 0.0
    %v139 = vrot.slane %v138, 4
    %v140 = vadd.f32 %v138, %v139
    %v141 = vrot.slane %v140, 2
    %v142 = vadd.f32 %v140, %v141
    %v143 = vrot.slane %v142, 1
    %v144 = vadd.f32 %v142, %v143
    %v145 = vmul.f32 %v144, 0.125
    %v146 = vmul.f32 %v136, %v136
    %v147 = vsub.f32 %v145, %v146
    %v148 = vmax.f32 %v147, 0.0
    %v149 = vadd.f32 %v148, 1e-05
    %v150 = vrsqrt.pop %v149
    %v151 = vmul.f32 %v150, %v149
    %v152 = vmul.f32 %v151, %v150
    %v153 = vmul.f32 0.5, %v152
    %v154 = vsub.f32 1.5, %v153
    %v155 = vmul.f32 %v150, %v154
    %vm156 = vweird.f32 %v149
    %vm157 = vweird.f32 %v150
    %vm158 = vmor %vm156, %vm157
    %v159 = vsel %vm158, %v150, %v155
    %v160 = vmul.f32 %v85, %v159
    %v161 = vmul.f32 %v136, %v160
    %v163 = vrot.slane %v161, 7
    %v165 = vsub.f32 %v85, %v163
    %v166 = vperm.slane %v160, 2
    %v167 = vmul.f32 %v128, %v166
    %v168 = vperm.slane %v165, 3
    %v169 = vadd.f32 %v167, %v168
    %170 = vst.msk [vmem:[#allocation8] sm:$0xff] %vm86, %v169
    // Predicated region
    $region26: #{tpu_custom_call.1} parent=1 // pred_check
      _
    $region27: #{tpu_custom_call.1} parent=1 // pred_check_branch
      %172 = sbr.rel (0) target = $region29
    $region28: #{tpu_custom_call.1} parent=1 // pred_region
      %174 = vsyncadd [#allocation4], 0
      %s176 = sshll.u32 [#allocation8], 4
      %s177 = int_to_ptr.vmem [resolvable:$true] %s176
      %s178 = sshll.u32 %s3, 4
      %s179 = int_to_ptr.hbm [resolvable:$true] %s178
      %181 = dma.vmem_to_hbm [thread:$0]  %s177, 128, %s179, [#allocation4]
    $region29: #{tpu_custom_call.1} parent=1 // pred_fallthru
      _
    // Predicated region
    $region30: #{tpu_custom_call.1} parent=1 // pred_check
      _
    $region31: #{tpu_custom_call.1} parent=1 // pred_check_branch
      %183 = sbr.rel (0) target = $region33
    $region32: #{tpu_custom_call.1} parent=1 // pred_region
      %185 = dma.done [#allocation4], 128
    $region33: #{tpu_custom_call.1} parent=1 // pred_fallthru
      _
    %186 = vsyncpa [#allocation3], 1
    %187 = vsyncpa [#allocation6], 1
    %188 = vsyncpa [#allocation4], 1

// kernel: tpu_custom_call.1
$region0: #{tpu_custom_call.1}
  #allocation0 [shape = 'u32[]', space=smem, size = 0x4, offset = 0x4, fixed_abs, tag = 'smem constant byte address 0x4 - core index']
  #allocation1 [shape = 'u32[72,128]{1,0:T(1,128)}', space=vmem, size = 0x9000, scoped, tag = 'internal scratch']
  %s0 = inlined_call_operand.hbm [shape: f32[8,16], index: 0, kind: input, shape index: {}]
  %s1 = inlined_call_operand.hbm [shape: f32[16,32], index: 1, kind: input, shape index: {}]
  %s2 = inlined_call_operand.hbm [shape: f32[8,32], index: 2, kind: input, shape index: {}]
  %s3 = inlined_call_operand.hbm [shape: f32[8,32], index: 3, kind: output, shape index: {}]
  %s4 = sld [smem:[#allocation0]]
  $region34: #{tpu_custom_call.1} parent=0
    _
  %s6 = ssub.s32 1, %s4
  %s7 = scalar_select 0, %s6, %s4
  $region1: #{tpu_custom_call.1} parent=0
    #allocation2 [shape = 'u8[4096]{0}', space=vmem, size = 0x1000, scoped, tag = 'input window, operand 0, single buffered']
    #allocation3 [shape = 's32[1]{0}', space=sflag, size = 0x4, scoped, tag = 'scoped memory for tpu_custom_call.1']
    #allocation4 [shape = 's32[1]{0}', space=sflag, size = 0x4, scoped, tag = 'scoped memory for tpu_custom_call.1']
    #allocation5 [shape = 'u8[8192]{0}', space=vmem, size = 0x2000, scoped, tag = 'input window, operand 1, single buffered']
    #allocation6 [shape = 's32[1]{0}', space=sflag, size = 0x4, scoped, tag = 'scoped memory for tpu_custom_call.1']
    #allocation7 [shape = 'u8[4096]{0}', space=vmem, size = 0x1000, scoped, tag = 'input window, operand 2, single buffered']
    #allocation8 [shape = 'u8[4096]{0}', space=vmem, size = 0x1000, scoped, tag = 'output window, operand 0, single buffered']
    %8 = vsyncpa [#allocation3], 0
    %9 = vsyncpa [#allocation6], 0
    %10 = vsyncpa [#allocation4], 0
    // Predicated region
    $region2: #{tpu_custom_call.1} parent=1 // pred_check
      _
    $region3: #{tpu_custom_call.1} parent=1 // pred_check_branch
      %12 = sbr.rel (0) target = $region5
    $region4: #{tpu_custom_call.1} parent=1 // pred_region
      %14 = vsyncadd [#allocation3], 0
      %s16 = sshll.u32 %s0, 4
      %s17 = int_to_ptr.hbm [resolvable:$true] %s16
      %s18 = sshll.u32 [#allocation2], 4
      %s19 = int_to_ptr.vmem [resolvable:$true] %s18
      %21 = dma.hbm_to_vmem [thread:$0]  %s17, 128, %s19, [#allocation3]
    $region5: #{tpu_custom_call.1} parent=1 // pred_fallthru
      _
    // Predicated region
    $region6: #{tpu_custom_call.1} parent=1 // pred_check
      _
    $region7: #{tpu_custom_call.1} parent=1 // pred_check_branch
      %23 = sbr.rel (0) target = $region9
    $region8: #{tpu_custom_call.1} parent=1 // pred_region
      %25 = vsyncadd [#allocation6], 0
      %s26 = sshll.u32 %s1, 4
      %s27 = int_to_ptr.hbm [resolvable:$true] %s26
      %s28 = sshll.u32 [#allocation5], 4
      %s29 = int_to_ptr.vmem [resolvable:$true] %s28
      %34 = dma.hbm_to_vmem [thread:$0]  %s27, 256, %s29, [#allocation6], 128, 128, 8
    $region9: #{tpu_custom_call.1} parent=1 // pred_fallthru
      _
    // Predicated region
    $region10: #{tpu_custom_call.1} parent=1 // pred_check
      _
    $region11: #{tpu_custom_call.1} parent=1 // pred_check_branch
      %36 = sbr.rel (0) target = $region13
    $region12: #{tpu_custom_call.1} parent=1 // pred_region
      %38 = vsyncadd [#allocation6], 0
      %s40 = sshll.u32 %s2, 4
      %s41 = int_to_ptr.hbm [resolvable:$true] %s40
      %s42 = sshll.u32 [#allocation7], 4
      %s43 = int_to_ptr.vmem [resolvable:$true] %s42
      %45 = dma.hbm_to_vmem [thread:$0]  %s41, 128, %s43, [#allocation6]
    $region13: #{tpu_custom_call.1} parent=1 // pred_fallthru
      _
    // Predicated region
    $region14: #{tpu_custom_call.1} parent=1 // pred_check
      _
    $region15: #{tpu_custom_call.1} parent=1 // pred_check_branch
      %47 = sbr.rel (0) target = $region17
    $region16: #{tpu_custom_call.1} parent=1 // pred_region
      %49 = dma.done [#allocation3], 128
    $region17: #{tpu_custom_call.1} parent=1 // pred_fallthru
      _
    // Predicated region
    $region18: #{tpu_custom_call.1} parent=1 // pred_check
      _
    $region19: #{tpu_custom_call.1} parent=1 // pred_check_branch
      %51 = sbr.rel (0) target = $region21
    $region20: #{tpu_custom_call.1} parent=1 // pred_region
      %53 = dma.done [#allocation6], 256
    $region21: #{tpu_custom_call.1} parent=1 // pred_fallthru
      _
    // Predicated region
    $region22: #{tpu_custom_call.1} parent=1 // pred_check
      _
    $region23: #{tpu_custom_call.1} parent=1 // pred_check_branch
      %55 = sbr.rel (0) target = $region25
    $region24: #{tpu_custom_call.1} parent=1 // pred_region
      %57 = dma.done [#allocation6], 128
    $region25: #{tpu_custom_call.1} parent=1 // pred_fallthru
      _
    %v58 = vld [vmem:[#allocation2] sm:$0xff]
    %v59 = vld [vmem:[#allocation5] sm:$0xff]
    %v60 = vld [vmem:[#allocation5 + $0x8] sm:$0xff]
    %vm61 = vcmask 130048
    %v63 = vsel %vm61, %v58, 0
    %65 = vmatpush.msra.mxu0 0.0
    %66 = vmatpush.msra.mxu0 0.0
    %67 = vmatpush.msra.mxu0 0.0
    %68 = vmatpush.msra.mxu0 0.0
    %69 = vmatpush.msra.mxu0 0.0
    %70 = vmatpush.msra.mxu0 0.0
    %71 = vmatpush.msra.mxu0 0.0
    %72 = vmatpush.msra.mxu0 0.0
    %73 = vmatpush.msra.mxu0 0.0
    %74 = vmatpush.msra.mxu0 0.0
    %75 = vmatpush.msra.mxu0 0.0
    %76 = vmatpush.msra.mxu0 0.0
    %77 = vmatpush.msra.mxu0 0.0
    %78 = vmatpush.msra.mxu0 0.0
    %79 = vmatpush.msra.mxu0 %v60
    %80 = vmatpush.msra.mxu0 %v59
    %81 = vmatmul.f32.gmra.mxu0 %v63
    %v82 = vpop.f32.mrf.mxu0
    %v83 = vadd.f32 0.0, %v82
    %84 = vdwg.mxu0
    %v85 = vld [vmem:[#allocation7] sm:$0xff]
    %vm86 = vcmask 261120
    %v87 = vsel %vm86, %v83, 0.0
    %v88 = vrot.slane %v87, 4
    %v89 = vadd.f32 %v87, %v88
    %v90 = vrot.slane %v89, 2
    %v91 = vadd.f32 %v89, %v90
    %v92 = vrot.slane %v91, 1
    %v93 = vadd.f32 %v91, %v92
    %v94 = vmul.f32 %v93, 0.125
    %v95 = vmul.f32 %v83, %v83
    %v96 = vsel %vm86, %v95, 0.0
    %v97 = vrot.slane %v96, 4
    %v98 = vadd.f32 %v96, %v97
    %v99 = vrot.slane %v98, 2
    %v100 = vadd.f32 %v98, %v99
    %v101 = vrot.slane %v100, 1
    %v102 = vadd.f32 %v100, %v101
    %v103 = vmul.f32 %v102, 0.125
    %v104 = vmul.f32 %v94, %v94
    %v105 = vsub.f32 %v103, %v104
    %v106 = vmax.f32 %v105, 0.0
    %v107 = vadd.f32 %v106, 1e-05
    %v108 = vrsqrt.pop %v107
    %v109 = vmul.f32 %v108, %v107
    %v110 = vmul.f32 %v109, %v108
    %v111 = vmul.f32 0.5, %v110
    %v112 = vsub.f32 1.5, %v111
    %v113 = vmul.f32 %v108, %v112
    %vm114 = vweird.f32 %v107
    %vm115 = vweird.f32 %v108
    %vm116 = vmor %vm114, %vm115
    %v117 = vsel %vm116, %v108, %v113
    %v118 = vmul.f32 %v85, %v117
    %v119 = vmul.f32 %v94, %v118
    %v121 = vrot.slane %v119, 7
    %v123 = vsub.f32 %v85, %v121
    %v124 = vperm.slane %v118, 0
    %v125 = vmul.f32 %v83, %v124
    %v126 = vperm.slane %v123, 1
    %v127 = vadd.f32 %v125, %v126
    %v128 = vmax.f32 %v127, 0.0
    %v129 = vsel %vm86, %v128, 0.0
    %v130 = vrot.slane %v129, 4
    %v131 = vadd.f32 %v129, %v130
    %v132 = vrot.slane %v131, 2
    %v133 = vadd.f32 %v131, %v132
    %v134 = vrot.slane %v133, 1
    %v135 = vadd.f32 %v133, %v134
    %v136 = vmul.f32 %v135, 0.125
    %v137 = vmul.f32 %v128, %v128
    %v138 = vsel %vm86, %v137, 0.0
    %v139 = vrot.slane %v138, 4
    %v140 = vadd.f32 %v138, %v139
    %v141 = vrot.slane %v140, 2
    %v142 = vadd.f32 %v140, %v141
    %v143 = vrot.slane %v142, 1
    %v144 = vadd.f32 %v142, %v143
    %v145 = vmul.f32 %v144, 0.125
    %v146 = vmul.f32 %v136, %v136
    %v147 = vsub.f32 %v145, %v146
    %v148 = vmax.f32 %v147, 0.0
    %v149 = vadd.f32 %v148, 1e-05
    %v150 = vrsqrt.pop %v149
    %v151 = vmul.f32 %v150, %v149
    %v152 = vmul.f32 %v151, %v150
    %v153 = vmul.f32 0.5, %v152
    %v154 = vsub.f32 1.5, %v153
    %v155 = vmul.f32 %v150, %v154
    %vm156 = vweird.f32 %v149
    %vm157 = vweird.f32 %v150
    %vm158 = vmor %vm156, %vm157
    %v159 = vsel %vm158, %v150, %v155
    %v160 = vmul.f32 %v85, %v159
    %v161 = vmul.f32 %v136, %v160
    %v163 = vrot.slane %v161, 7
    %v165 = vsub.f32 %v85, %v163
    %v166 = vperm.slane %v160, 2
    %v167 = vmul.f32 %v128, %v166
    %v168 = vperm.slane %v165, 3
    %v169 = vadd.f32 %v167, %v168
    %170 = vst.msk [vmem:[#allocation8] sm:$0xff] %vm86, %v169
    // Predicated region
    $region26: #{tpu_custom_call.1} parent=1 // pred_check
      _
    $region27: #{tpu_custom_call.1} parent=1 // pred_check_branch
      %172 = sbr.rel (0) target = $region29
    $region28: #{tpu_custom_call.1} parent=1 // pred_region
      %174 = vsyncadd [#allocation4], 0
      %s176 = sshll.u32 [#allocation8], 4
      %s177 = int_to_ptr.vmem [resolvable:$true] %s176
      %s178 = sshll.u32 %s3, 4
      %s179 = int_to_ptr.hbm [resolvable:$true] %s178
      %181 = dma.vmem_to_hbm [thread:$0]  %s177, 128, %s179, [#allocation4]
    $region29: #{tpu_custom_call.1} parent=1 // pred_fallthru
      _
    // Predicated region
    $region30: #{tpu_custom_call.1} parent=1 // pred_check
      _
    $region31: #{tpu_custom_call.1} parent=1 // pred_check_branch
      %183 = sbr.rel (0) target = $region33
    $region32: #{tpu_custom_call.1} parent=1 // pred_region
      %185 = dma.done [#allocation4], 128
    $region33: #{tpu_custom_call.1} parent=1 // pred_fallthru
      _
    %186 = vsyncpa [#allocation3], 1
    %187 = vsyncpa [#allocation6], 1
    %188 = vsyncpa [#allocation4], 1

</llo_original>
